<compile_context>
chip_gen: v5e
topology: v5e:2x2
jax: 0.10.0
libtpu: 0.0.40
codegen_flags: <defaults>
</compile_context>

<pallas_src>
import functools

import jax
import jax.numpy as jnp
from jax.experimental import pallas as pl
from jax.experimental.pallas import tpu as pltpu


def _rln_kernel(x_ref, g_ref, b_ref, m1w_ref, m1b_ref, m2w_ref, m2b_ref,
                out_ref, rescale_ref, rebias_ref, *, eps, inv_n):
    """One batch element: fused mean/var + normalize + affine + meta affines."""
    x = x_ref[...].astype(jnp.float32)                 # (1, C, HW)
    mean = jnp.sum(x) * inv_n                          # scalar
    centered = x - mean
    var = jnp.sum(centered * centered) * inv_n         # biased variance (matches torch)
    std = jnp.sqrt(var + eps)
    inv_std = 1.0 / std
    out_ref[...] = ((centered * inv_std) * g_ref[...] + b_ref[...]).astype(out_ref.dtype)
    rescale_ref[...] = (m1w_ref[...] * std + m1b_ref[...]).astype(rescale_ref.dtype)
    rebias_ref[...] = (m2w_ref[...] * mean + m2b_ref[...]).astype(rebias_ref.dtype)


def rln_forward(x, weight, bias, meta1_w, meta1_b, meta2_w, meta2_b, *, eps=1e-5):
    """RLN forward.

    Args:
      x:       (N, C, H, W) float32, NCHW (PyTorch layout)
      weight:  (C,)  -- the (1, C, 1, 1) scale parameter, flattened
      bias:    (C,)  -- the (1, C, 1, 1) shift parameter, flattened
      meta1_w: (C,)  -- Conv2d(1, C, 1) weight (C,1,1,1) flattened; meta1_b: (C,)
      meta2_w: (C,)  -- Conv2d(1, C, 1) weight (C,1,1,1) flattened; meta2_b: (C,)
    Returns:
      out:     (N, C, H, W)
      rescale: (N, C, 1, 1)
      rebias:  (N, C, 1, 1)
    """
    N, C, H, W = x.shape
    HW = H * W

    # Lane-dense layout: (N, C, H*W). Reshape is free (contiguous).
    x3 = x.reshape(N, C, HW)

    # Per-channel params as (1, C, 1) so they broadcast against (1, C, HW)
    # inside the kernel with no cross-lane moves.
    g = weight.reshape(1, C, 1)
    b = bias.reshape(1, C, 1)
    m1w = meta1_w.reshape(1, C, 1)
    m1b = meta1_b.reshape(1, C, 1)
    m2w = meta2_w.reshape(1, C, 1)
    m2b = meta2_b.reshape(1, C, 1)

    img_spec = pl.BlockSpec((1, C, HW), lambda n: (n, 0, 0))   # one image per step
    par_spec = pl.BlockSpec((1, C, 1), lambda n: (0, 0, 0))    # params, reused
    vec_spec = pl.BlockSpec((1, C, 1), lambda n: (n, 0, 0))    # per-batch outputs

    kernel = functools.partial(_rln_kernel, eps=float(eps), inv_n=1.0 / float(C * HW))

    # TODO(synk): for images where a single (C, H*W) f32 slab would not fit in
    # VMEM, split the spatial axis into a second ("arbitrary") grid dim with a
    # two-pass (stats accumulate, then normalize) scheme.
    out, rescale, rebias = pl.pallas_call(
        kernel,
        out_shape=(
            jax.ShapeDtypeStruct((N, C, HW), x.dtype),
            jax.ShapeDtypeStruct((N, C, 1), x.dtype),
            jax.ShapeDtypeStruct((N, C, 1), x.dtype),
        ),
        grid_spec=pltpu.PrefetchScalarGridSpec(
            num_scalar_prefetch=0,
            grid=(N,),
            in_specs=[img_spec, par_spec, par_spec, par_spec, par_spec,
                      par_spec, par_spec],
            out_specs=(img_spec, vec_spec, vec_spec),
        ),
        compiler_params=pltpu.CompilerParams(
            dimension_semantics=("parallel",)),
    )(x3, g, b, m1w, m1b, m2w, m2b)

    return (out.reshape(N, C, H, W),
            rescale.reshape(N, C, 1, 1),
            rebias.reshape(N, C, 1, 1))


def _reference_rln(x, weight, bias, m1w, m1b, m2w, m2b, eps=1e-5):
    """Pure-JAX reference matching the PyTorch RLN.forward."""
    mean = jnp.mean(x, axis=(1, 2, 3), keepdims=True)
    std = jnp.sqrt(jnp.mean((x - mean) ** 2, axis=(1, 2, 3), keepdims=True) + eps)
    normalized = (x - mean) / std
    out = normalized * weight.reshape(1, -1, 1, 1) + bias.reshape(1, -1, 1, 1)
    rescale = std * m1w.reshape(1, -1, 1, 1) + m1b.reshape(1, -1, 1, 1)
    rebias = mean * m2w.reshape(1, -1, 1, 1) + m2b.reshape(1, -1, 1, 1)
    return out, rescale, rebias


if __name__ == "__main__":
    # Small config consistent with dehazeformer RLN: NCHW input, dim = C.
    N, C, H, W = 2, 32, 16, 16
    eps = 1e-5

    key = jax.random.PRNGKey(0)
    kx, k1, k2, k3, k4 = jax.random.split(key, 5)
    x = jax.random.normal(kx, (N, C, H, W), dtype=jnp.float32)

    # Deterministic synthetic parameters (random perturbations of the module's
    # init: weight~1, bias~0, meta weights ~ trunc_normal(0.02), meta1.bias=1,
    # meta2.bias=0).
    weight = 1.0 + 0.1 * jax.random.normal(k1, (C,), dtype=jnp.float32)
    bias = 0.1 * jax.random.normal(k2, (C,), dtype=jnp.float32)
    meta1_w = 0.02 * jax.random.normal(k3, (C,), dtype=jnp.float32)
    meta1_b = jnp.ones((C,), dtype=jnp.float32)
    meta2_w = 0.02 * jax.random.normal(k4, (C,), dtype=jnp.float32)
    meta2_b = jnp.zeros((C,), dtype=jnp.float32)

    out, rescale, rebias = jax.block_until_ready(
        rln_forward(x, weight, bias, meta1_w, meta1_b, meta2_w, meta2_b, eps=eps))

    ro, rr, rb = _reference_rln(x, weight, bias, meta1_w, meta1_b,
                                meta2_w, meta2_b, eps)
    assert out.shape == ro.shape, (out.shape, ro.shape)
    assert rescale.shape == rr.shape, (rescale.shape, rr.shape)
    assert rebias.shape == rb.shape, (rebias.shape, rb.shape)
    assert jnp.allclose(out, ro, atol=1e-4, rtol=1e-4), \
        float(jnp.max(jnp.abs(out - ro)))
    assert jnp.allclose(rescale, rr, atol=1e-5, rtol=1e-5), \
        float(jnp.max(jnp.abs(rescale - rr)))
    assert jnp.allclose(rebias, rb, atol=1e-5, rtol=1e-5), \
        float(jnp.max(jnp.abs(rebias - rb)))

    print("KERNEL_OK")
</pallas_src>

<mosaic_0001>
module attributes {stable_mosaic.version = 11 : i64} {
  func.func @_rln_kernel(%arg0: i32, %arg1: memref<1x32x256xf32, #tpu.memory_space<vmem>>, %arg2: memref<1x32x1xf32, #tpu.memory_space<vmem>>, %arg3: memref<1x32x1xf32, #tpu.memory_space<vmem>>, %arg4: memref<1x32x1xf32, #tpu.memory_space<vmem>>, %arg5: memref<1x32x1xf32, #tpu.memory_space<vmem>>, %arg6: memref<1x32x1xf32, #tpu.memory_space<vmem>>, %arg7: memref<1x32x1xf32, #tpu.memory_space<vmem>>, %arg8: memref<1x32x256xf32, #tpu.memory_space<vmem>>, %arg9: memref<1x32x1xf32, #tpu.memory_space<vmem>>, %arg10: memref<1x32x1xf32, #tpu.memory_space<vmem>>) attributes {dimension_semantics = [#tpu.dimension_semantics<parallel>], iteration_bounds = array<i64: 2>, scalar_prefetch = 0 : i64, scratch_operands = 0 : i64, tpu.core_type = #tpu.core_type<tc>, window_params = [{transform_indices = @transform_0, window_bounds = array<i64: 1, 32, 256>}, {pipeline_mode = #tpu.pipeline_mode<synchronous>, transform_indices = @transform_1, window_bounds = array<i64: 1, 32, 1>}, {pipeline_mode = #tpu.pipeline_mode<synchronous>, transform_indices = @transform_2, window_bounds = array<i64: 1, 32, 1>}, {pipeline_mode = #tpu.pipeline_mode<synchronous>, transform_indices = @transform_3, window_bounds = array<i64: 1, 32, 1>}, {pipeline_mode = #tpu.pipeline_mode<synchronous>, transform_indices = @transform_4, window_bounds = array<i64: 1, 32, 1>}, {pipeline_mode = #tpu.pipeline_mode<synchronous>, transform_indices = @transform_5, window_bounds = array<i64: 1, 32, 1>}, {pipeline_mode = #tpu.pipeline_mode<synchronous>, transform_indices = @transform_6, window_bounds = array<i64: 1, 32, 1>}, {transform_indices = @transform_7, window_bounds = array<i64: 1, 32, 256>}, {transform_indices = @transform_8, window_bounds = array<i64: 1, 32, 1>}, {transform_indices = @transform_9, window_bounds = array<i64: 1, 32, 1>}]} {
    %c0 = arith.constant 0 : index
    %c0_0 = arith.constant 0 : index
    %c0_1 = arith.constant 0 : index
    %0 = vector.load %arg1[%c0, %c0_0, %c0_1] : memref<1x32x256xf32, #tpu.memory_space<vmem>>, vector<1x32x256xf32>
    %1 = vector.shape_cast %0 : vector<1x32x256xf32> to vector<1x1x32x256xf32>
    %cst = arith.constant dense<0.000000e+00> : vector<1xf32>
    %2 = vector.multi_reduction <add>, %1, %cst [1, 2, 3] : vector<1x1x32x256xf32> to vector<1xf32>
    %3 = vector.shape_cast %2 : vector<1xf32> to vector<1x1x1x1xf32>
    %4 = vector.extract %3[0, 0, 0, 0] : f32 from vector<1x1x1x1xf32>
    %cst_2 = arith.constant 1.22070313E-4 : f32
    %5 = arith.mulf %4, %cst_2 : f32
    %6 = vector.broadcast %5 : f32 to vector<1x32x256xf32>
    %7 = arith.subf %0, %6 : vector<1x32x256xf32>
    %8 = arith.mulf %7, %7 : vector<1x32x256xf32>
    %9 = vector.shape_cast %8 : vector<1x32x256xf32> to vector<1x1x32x256xf32>
    %cst_3 = arith.constant dense<0.000000e+00> : vector<1xf32>
    %10 = vector.multi_reduction <add>, %9, %cst_3 [1, 2, 3] : vector<1x1x32x256xf32> to vector<1xf32>
    %11 = vector.shape_cast %10 : vector<1xf32> to vector<1x1x1x1xf32>
    %12 = vector.extract %11[0, 0, 0, 0] : f32 from vector<1x1x1x1xf32>
    %cst_4 = arith.constant 1.22070313E-4 : f32
    %13 = arith.mulf %12, %cst_4 : f32
    %cst_5 = arith.constant 9.99999974E-6 : f32
    %14 = arith.addf %13, %cst_5 : f32
    %15 = math.sqrt %14 : f32
    %cst_6 = arith.constant 1.000000e+00 : f32
    %16 = arith.divf %cst_6, %15 : f32
    %17 = vector.broadcast %16 : f32 to vector<1x32x256xf32>
    %18 = arith.mulf %7, %17 : vector<1x32x256xf32>
    %c0_7 = arith.constant 0 : index
    %c0_8 = arith.constant 0 : index
    %c0_9 = arith.constant 0 : index
    %19 = vector.load %arg2[%c0_7, %c0_8, %c0_9] : memref<1x32x1xf32, #tpu.memory_space<vmem>>, vector<1x32x1xf32>
    %20 = vector.broadcast %19 : vector<1x32x1xf32> to vector<1x32x256xf32>
    %21 = arith.mulf %18, %20 : vector<1x32x256xf32>
    %c0_10 = arith.constant 0 : index
    %c0_11 = arith.constant 0 : index
    %c0_12 = arith.constant 0 : index
    %22 = vector.load %arg3[%c0_10, %c0_11, %c0_12] : memref<1x32x1xf32, #tpu.memory_space<vmem>>, vector<1x32x1xf32>
    %23 = vector.broadcast %22 : vector<1x32x1xf32> to vector<1x32x256xf32>
    %24 = arith.addf %21, %23 : vector<1x32x256xf32>
    %c0_13 = arith.constant 0 : index
    %c0_14 = arith.constant 0 : index
    %c0_15 = arith.constant 0 : index
    %25 = vector.load %arg8[%c0_13, %c0_14, %c0_15] : memref<1x32x256xf32, #tpu.memory_space<vmem>>, vector<1x32x256xf32>
    tpu.vector_store %arg8[%c0_13, %c0_14, %c0_15], %24 {strides = array<i32>} : memref<1x32x256xf32, #tpu.memory_space<vmem>>, vector<1x32x256xf32>,
    %c0_16 = arith.constant 0 : index
    %c0_17 = arith.constant 0 : index
    %c0_18 = arith.constant 0 : index
    %26 = vector.load %arg4[%c0_16, %c0_17, %c0_18] : memref<1x32x1xf32, #tpu.memory_space<vmem>>, vector<1x32x1xf32>
    %27 = vector.broadcast %15 : f32 to vector<1x32x1xf32>
    %28 = arith.mulf %26, %27 : vector<1x32x1xf32>
    %c0_19 = arith.constant 0 : index
    %c0_20 = arith.constant 0 : index
    %c0_21 = arith.constant 0 : index
    %29 = vector.load %arg5[%c0_19, %c0_20, %c0_21] : memref<1x32x1xf32, #tpu.memory_space<vmem>>, vector<1x32x1xf32>
    %30 = arith.addf %28, %29 : vector<1x32x1xf32>
    %c0_22 = arith.constant 0 : index
    %c0_23 = arith.constant 0 : index
    %c0_24 = arith.constant 0 : index
    %31 = vector.load %arg9[%c0_22, %c0_23, %c0_24] : memref<1x32x1xf32, #tpu.memory_space<vmem>>, vector<1x32x1xf32>
    tpu.vector_store %arg9[%c0_22, %c0_23, %c0_24], %30 {strides = array<i32>} : memref<1x32x1xf32, #tpu.memory_space<vmem>>, vector<1x32x1xf32>,
    %c0_25 = arith.constant 0 : index
    %c0_26 = arith.constant 0 : index
    %c0_27 = arith.constant 0 : index
    %32 = vector.load %arg6[%c0_25, %c0_26, %c0_27] : memref<1x32x1xf32, #tpu.memory_space<vmem>>, vector<1x32x1xf32>
    %33 = vector.broadcast %5 : f32 to vector<1x32x1xf32>
    %34 = arith.mulf %32, %33 : vector<1x32x1xf32>
    %c0_28 = arith.constant 0 : index
    %c0_29 = arith.constant 0 : index
    %c0_30 = arith.constant 0 : index
    %35 = vector.load %arg7[%c0_28, %c0_29, %c0_30] : memref<1x32x1xf32, #tpu.memory_space<vmem>>, vector<1x32x1xf32>
    %36 = arith.addf %34, %35 : vector<1x32x1xf32>
    %c0_31 = arith.constant 0 : index
    %c0_32 = arith.constant 0 : index
    %c0_33 = arith.constant 0 : index
    %37 = vector.load %arg10[%c0_31, %c0_32, %c0_33] : memref<1x32x1xf32, #tpu.memory_space<vmem>>, vector<1x32x1xf32>
    tpu.vector_store %arg10[%c0_31, %c0_32, %c0_33], %36 {strides = array<i32>} : memref<1x32x1xf32, #tpu.memory_space<vmem>>, vector<1x32x1xf32>,
    return
  }
  func.func @transform_0(%arg0: i32) -> (i32, i32, i32) {
    %c0_i32 = arith.constant 0 : i32
    %c0_i32_0 = arith.constant 0 : i32
    %c0_i32_1 = arith.constant 0 : i32
    return %arg0, %c0_i32, %c0_i32_0 : i32, i32, i32
  }
  func.func @transform_1(%arg0: i32) -> (i32, i32, i32) {
    %c0_i32 = arith.constant 0 : i32
    %c0_i32_0 = arith.constant 0 : i32
    %c0_i32_1 = arith.constant 0 : i32
    %c0_i32_2 = arith.constant 0 : i32
    return %c0_i32, %c0_i32_0, %c0_i32_1 : i32, i32, i32
  }
  func.func @transform_2(%arg0: i32) -> (i32, i32, i32) {
    %c0_i32 = arith.constant 0 : i32
    %c0_i32_0 = arith.constant 0 : i32
    %c0_i32_1 = arith.constant 0 : i32
    %c0_i32_2 = arith.constant 0 : i32
    return %c0_i32, %c0_i32_0, %c0_i32_1 : i32, i32, i32
  }
  func.func @transform_3(%arg0: i32) -> (i32, i32, i32) {
    %c0_i32 = arith.constant 0 : i32
    %c0_i32_0 = arith.constant 0 : i32
    %c0_i32_1 = arith.constant 0 : i32
    %c0_i32_2 = arith.constant 0 : i32
    return %c0_i32, %c0_i32_0, %c0_i32_1 : i32, i32, i32
  }
  func.func @transform_4(%arg0: i32) -> (i32, i32, i32) {
    %c0_i32 = arith.constant 0 : i32
    %c0_i32_0 = arith.constant 0 : i32
    %c0_i32_1 = arith.constant 0 : i32
    %c0_i32_2 = arith.constant 0 : i32
    return %c0_i32, %c0_i32_0, %c0_i32_1 : i32, i32, i32
  }
  func.func @transform_5(%arg0: i32) -> (i32, i32, i32) {
    %c0_i32 = arith.constant 0 : i32
    %c0_i32_0 = arith.constant 0 : i32
    %c0_i32_1 = arith.constant 0 : i32
    %c0_i32_2 = arith.constant 0 : i32
    return %c0_i32, %c0_i32_0, %c0_i32_1 : i32, i32, i32
  }
  func.func @transform_6(%arg0: i32) -> (i32, i32, i32) {
    %c0_i32 = arith.constant 0 : i32
    %c0_i32_0 = arith.constant 0 : i32
    %c0_i32_1 = arith.constant 0 : i32
    %c0_i32_2 = arith.constant 0 : i32
    return %c0_i32, %c0_i32_0, %c0_i32_1 : i32, i32, i32
  }
  func.func @transform_7(%arg0: i32) -> (i32, i32, i32) {
    %c0_i32 = arith.constant 0 : i32
    %c0_i32_0 = arith.constant 0 : i32
    %c0_i32_1 = arith.constant 0 : i32
    return %arg0, %c0_i32, %c0_i32_0 : i32, i32, i32
  }
  func.func @transform_8(%arg0: i32) -> (i32, i32, i32) {
    %c0_i32 = arith.constant 0 : i32
    %c0_i32_0 = arith.constant 0 : i32
    %c0_i32_1 = arith.constant 0 : i32
    return %arg0, %c0_i32, %c0_i32_0 : i32, i32, i32
  }
  func.func @transform_9(%arg0: i32) -> (i32, i32, i32) {
    %c0_i32 = arith.constant 0 : i32
    %c0_i32_0 = arith.constant 0 : i32
    %c0_i32_1 = arith.constant 0 : i32
    return %arg0, %c0_i32, %c0_i32_0 : i32, i32, i32
  }
}

</mosaic_0001>

<llo_original>
// kernel: tpu_custom_call.1
$region0: #{tpu_custom_call.1}
  #allocation0 [shape = 'u32[]', space=smem, size = 0x4, offset = 0x4, fixed_abs, tag = 'smem constant byte address 0x4 - core index']
  #allocation1 [shape = 'u32[72,128]{1,0:T(1,128)}', space=vmem, size = 0x9000, scoped, tag = 'internal scratch']
  %s0 = inlined_call_operand.hbm [shape: f32[2,32,256], index: 0, kind: input, shape index: {}]
  %s1 = inlined_call_operand.vmem [shape: f32[1,32,1], index: 1, kind: input, shape index: {}]
  %s2 = inlined_call_operand.vmem [shape: f32[1,32,1], index: 2, kind: input, shape index: {}]
  %s3 = inlined_call_operand.vmem [shape: f32[1,32,1], index: 3, kind: input, shape index: {}]
  %s4 = inlined_call_operand.vmem [shape: f32[1,32,1], index: 4, kind: input, shape index: {}]
  %s5 = inlined_call_operand.vmem [shape: f32[1,32,1], index: 5, kind: input, shape index: {}]
  %s6 = inlined_call_operand.vmem [shape: f32[1,32,1], index: 6, kind: input, shape index: {}]
  %s7 = inlined_call_operand.hbm [shape: f32[2,32,256], index: 7, kind: output, shape index: {0}]
  %s8 = inlined_call_operand.vmem [shape: f32[2,32,1], index: 8, kind: output, shape index: {1}]
  %s9 = inlined_call_operand.vmem [shape: f32[2,32,1], index: 9, kind: output, shape index: {2}]
  %10 = xla_tuple %s7, %s8, %s9
  %s11 = sld [smem:[#allocation0]]
  $region81: #{tpu_custom_call.1} parent=0
    _
  %s13 = ssub.s32 1, %s11
  %s14 = scalar_select 0, %s13, %s11
  $region1: #{tpu_custom_call.1} parent=0
    #allocation2 [shape = 'u8[65536]{0}', space=vmem, size = 0x10000, scoped, tag = 'input window, operand 0']
    #allocation3 [shape = 's32[2]{0}', space=sflag, size = 0x8, scoped, tag = 'scoped memory for tpu_custom_call.1']
    #allocation4 [shape = 's32[2]{0}', space=sflag, size = 0x8, scoped, tag = 'scoped memory for tpu_custom_call.1']
    #allocation5 [shape = 'u8[65536]{0}', space=vmem, size = 0x10000, scoped, tag = 'output window, operand 0']
    %15 = vsyncpa [#allocation3], 0
    %s16 = scalar_lea.sflag [#allocation3], 1
    %17 = vsyncpa %s16, 0
    %18 = vsyncpa [#allocation4], 0
    %s19 = scalar_lea.sflag [#allocation4], 1
    %20 = vsyncpa %s19, 0
    loop: start=0, step=1, limit=4
    $region2: #{tpu_custom_call.1} parent=1 // loop_pre_header
      _
    $region3: #{tpu_custom_call.1} parent=1 // loop_header
      %s22 = sphi 0, %s26
      %p23 = scmp.ge.s32.totalorder %s22, 4
      %s32 = sphi 0, %s34
      %s35 = sphi 0, %s32
      %s36 = sphi 0, %s35
      %s52 = sphi 0, %s36
      %s56 = sphi 0, %s56
      %s58 = sphi 0, %s56
      %s59 = sphi 0, %s58
      %s73 = sphi 0, %s59
      %s77 = sphi 0, %s77
      %s79 = sphi 0, %s77
      %s80 = sphi 0, %s79
      %s94 = sphi 0, %s80
      %s98 = sphi 0, %s98
      %s100 = sphi 0, %s98
      %s101 = sphi 0, %s100
      %s115 = sphi 0, %s101
      %s119 = sphi 0, %s119
      %s121 = sphi 0, %s119
      %s122 = sphi 0, %s121
      %s136 = sphi 0, %s122
      %s140 = sphi 0, %s140
      %s142 = sphi 0, %s140
      %s143 = sphi 0, %s142
      %s157 = sphi 0, %s143
      %s161 = sphi 0, %s161
      %s163 = sphi 0, %s161
      %s164 = sphi 0, %s163
      %s178 = sphi 0, %s164
      %s184 = sphi 0, %s186
      %s187 = sphi 0, %s184
      %s188 = sphi 0, %s187
      %s204 = sphi 0, %s188
      %s210 = sphi 0, %s212
      %s213 = sphi 0, %s210
      %s214 = sphi 0, %s213
      %s230 = sphi 0, %s214
      %s236 = sphi 0, %s238
      %s239 = sphi 0, %s236
      %s240 = sphi 0, %s239
      %s256 = sphi 0, %s240
    $region4: #{tpu_custom_call.1} parent=1 // loop_header_branch
      %25 = sbr.rel (%p23) target = $region8
    $region5: #{tpu_custom_call.1} parent=1 // loop_body
      %s27 = ssub.s32 %s22, 1
      %s28 = ssub.s32 %s22, 2
      %s29 = sadd.s32 %s22, 1
      %s30 = ssub.s32 %s22, %s29
      %p31 = scmp.eq.s32.totalorder %s30, 0
      %s33 = sadd.s32 %s32, 1
      %s34 = scalar_select %p31, %s32, %s33
      %p37 = pneg %p31
      %p38 = scmp.eq.s32.totalorder %s22, 1
      %p39 = por %p37, %p38
      %p40 = scmp.ne.s32.totalorder %s32, %s35
      %p41 = scmp.eq.s32.totalorder %s22, 0
      %p42 = por %p40, %p41
      %p43 = scmp.ne.s32.totalorder %s32, %s35
      %p44 = scmp.eq.s32.totalorder %s27, 1
      %p45 = por %p43, %p44
      %p46 = scmp.ne.s32.totalorder %s35, %s36
      %p47 = scmp.eq.s32.totalorder %s27, 0
      %p48 = por %p46, %p47
      %p49 = scmp.ne.s32.totalorder %s35, %s36
      %p50 = scmp.eq.s32.totalorder %s28, 1
      %p51 = por %p49, %p50
      %p53 = scmp.ne.s32.totalorder %s36, %s52
      %p54 = scmp.eq.s32.totalorder %s28, 0
      %p55 = por %p53, %p54
      %s57 = sadd.s32 %s56, 1
      %p60 = scmp.eq.s32.totalorder %s22, 1
      %p61 = scmp.ne.s32.totalorder %s56, %s58
      %p62 = scmp.eq.s32.totalorder %s22, 0
      %p63 = por %p61, %p62
      %p64 = scmp.ne.s32.totalorder %s56, %s58
      %p65 = scmp.eq.s32.totalorder %s27, 1
      %p66 = por %p64, %p65
      %p67 = scmp.ne.s32.totalorder %s58, %s59
      %p68 = scmp.eq.s32.totalorder %s27, 0
      %p69 = por %p67, %p68
      %p70 = scmp.ne.s32.totalorder %s58, %s59
      %p71 = scmp.eq.s32.totalorder %s28, 1
      %p72 = por %p70, %p71
      %p74 = scmp.ne.s32.totalorder %s59, %s73
      %p75 = scmp.eq.s32.totalorder %s28, 0
      %p76 = por %p74, %p75
      %s78 = sadd.s32 %s77, 1
      %p81 = scmp.eq.s32.totalorder %s22, 1
      %p82 = scmp.ne.s32.totalorder %s77, %s79
      %p83 = scmp.eq.s32.totalorder %s22, 0
      %p84 = por %p82, %p83
      %p85 = scmp.ne.s32.totalorder %s77, %s79
      %p86 = scmp.eq.s32.totalorder %s27, 1
      %p87 = por %p85, %p86
      %p88 = scmp.ne.s32.totalorder %s79, %s80
      %p89 = scmp.eq.s32.totalorder %s27, 0
      %p90 = por %p88, %p89
      %p91 = scmp.ne.s32.totalorder %s79, %s80
      %p92 = scmp.eq.s32.totalorder %s28, 1
      %p93 = por %p91, %p92
      %p95 = scmp.ne.s32.totalorder %s80, %s94
      %p96 = scmp.eq.s32.totalorder %s28, 0
      %p97 = por %p95, %p96
      %s99 = sadd.s32 %s98, 1
      %p102 = scmp.eq.s32.totalorder %s22, 1
      %p103 = scmp.ne.s32.totalorder %s98, %s100
      %p104 = scmp.eq.s32.totalorder %s22, 0
      %p105 = por %p103, %p104
      %p106 = scmp.ne.s32.totalorder %s98, %s100
      %p107 = scmp.eq.s32.totalorder %s27, 1
      %p108 = por %p106, %p107
      %p109 = scmp.ne.s32.totalorder %s100, %s101
      %p110 = scmp.eq.s32.totalorder %s27, 0
      %p111 = por %p109, %p110
      %p112 = scmp.ne.s32.totalorder %s100, %s101
      %p113 = scmp.eq.s32.totalorder %s28, 1
      %p114 = por %p112, %p113
      %p116 = scmp.ne.s32.totalorder %s101, %s115
      %p117 = scmp.eq.s32.totalorder %s28, 0
      %p118 = por %p116, %p117
      %s120 = sadd.s32 %s119, 1
      %p123 = scmp.eq.s32.totalorder %s22, 1
      %p124 = scmp.ne.s32.totalorder %s119, %s121
      %p125 = scmp.eq.s32.totalorder %s22, 0
      %p126 = por %p124, %p125
      %p127 = scmp.ne.s32.totalorder %s119, %s121
      %p128 = scmp.eq.s32.totalorder %s27, 1
      %p129 = por %p127, %p128
      %p130 = scmp.ne.s32.totalorder %s121, %s122
      %p131 = scmp.eq.s32.totalorder %s27, 0
      %p132 = por %p130, %p131
      %p133 = scmp.ne.s32.totalorder %s121, %s122
      %p134 = scmp.eq.s32.totalorder %s28, 1
      %p135 = por %p133, %p134
      %p137 = scmp.ne.s32.totalorder %s122, %s136
      %p138 = scmp.eq.s32.totalorder %s28, 0
      %p139 = por %p137, %p138
      %s141 = sadd.s32 %s140, 1
      %p144 = scmp.eq.s32.totalorder %s22, 1
      %p145 = scmp.ne.s32.totalorder %s140, %s142
      %p146 = scmp.eq.s32.totalorder %s22, 0
      %p147 = por %p145, %p146
      %p148 = scmp.ne.s32.totalorder %s140, %s142
      %p149 = scmp.eq.s32.totalorder %s27, 1
      %p150 = por %p148, %p149
      %p151 = scmp.ne.s32.totalorder %s142, %s143
      %p152 = scmp.eq.s32.totalorder %s27, 0
      %p153 = por %p151, %p152
      %p154 = scmp.ne.s32.totalorder %s142, %s143
      %p155 = scmp.eq.s32.totalorder %s28, 1
      %p156 = por %p154, %p155
      %p158 = scmp.ne.s32.totalorder %s143, %s157
      %p159 = scmp.eq.s32.totalorder %s28, 0
      %p160 = por %p158, %p159
      %s162 = sadd.s32 %s161, 1
      %p165 = scmp.eq.s32.totalorder %s22, 1
      %p166 = scmp.ne.s32.totalorder %s161, %s163
      %p167 = scmp.eq.s32.totalorder %s22, 0
      %p168 = por %p166, %p167
      %p169 = scmp.ne.s32.totalorder %s161, %s163
      %p170 = scmp.eq.s32.totalorder %s27, 1
      %p171 = por %p169, %p170
      %p172 = scmp.ne.s32.totalorder %s163, %s164
      %p173 = scmp.eq.s32.totalorder %s27, 0
      %p174 = por %p172, %p173
      %p175 = scmp.ne.s32.totalorder %s163, %s164
      %p176 = scmp.eq.s32.totalorder %s28, 1
      %p177 = por %p175, %p176
      %p179 = scmp.ne.s32.totalorder %s164, %s178
      %p180 = scmp.eq.s32.totalorder %s28, 0
      %p181 = por %p179, %p180
      %s182 = ssub.s32 %s22, %s29
      %p183 = scmp.eq.s32.totalorder %s182, 0
      %s185 = sadd.s32 %s184, 1
      %s186 = scalar_select %p183, %s184, %s185
      %p189 = pneg %p183
      %p190 = scmp.eq.s32.totalorder %s22, 1
      %p191 = por %p189, %p190
      %p192 = scmp.ne.s32.totalorder %s184, %s187
      %p193 = scmp.eq.s32.totalorder %s22, 0
      %p194 = por %p192, %p193
      %p195 = scmp.ne.s32.totalorder %s184, %s187
      %p196 = scmp.eq.s32.totalorder %s27, 1
      %p197 = por %p195, %p196
      %p198 = scmp.ne.s32.totalorder %s187, %s188
      %p199 = scmp.eq.s32.totalorder %s27, 0
      %p200 = por %p198, %p199
      %p201 = scmp.ne.s32.totalorder %s187, %s188
      %p202 = scmp.eq.s32.totalorder %s28, 1
      %p203 = por %p201, %p202
      %p205 = scmp.ne.s32.totalorder %s188, %s204
      %p206 = scmp.eq.s32.totalorder %s28, 0
      %p207 = por %p205, %p206
      %s208 = ssub.s32 %s22, %s29
      %p209 = scmp.eq.s32.totalorder %s208, 0
      %s211 = sadd.s32 %s210, 1
      %s212 = scalar_select %p209, %s210, %s211
      %p215 = pneg %p209
      %p216 = scmp.eq.s32.totalorder %s22, 1
      %p217 = por %p215, %p216
      %p218 = scmp.ne.s32.totalorder %s210, %s213
      %p219 = scmp.eq.s32.totalorder %s22, 0
      %p220 = por %p218, %p219
      %p221 = scmp.ne.s32.totalorder %s210, %s213
      %p222 = scmp.eq.s32.totalorder %s27, 1
      %p223 = por %p221, %p222
      %p224 = scmp.ne.s32.totalorder %s213, %s214
      %p225 = scmp.eq.s32.totalorder %s27, 0
      %p226 = por %p224, %p225
      %p227 = scmp.ne.s32.totalorder %s213, %s214
      %p228 = scmp.eq.s32.totalorder %s28, 1
      %p229 = por %p227, %p228
      %p231 = scmp.ne.s32.totalorder %s214, %s230
      %p232 = scmp.eq.s32.totalorder %s28, 0
      %p233 = por %p231, %p232
      %s234 = ssub.s32 %s22, %s29
      %p235 = scmp.eq.s32.totalorder %s234, 0
      %s237 = sadd.s32 %s236, 1
      %s238 = scalar_select %p235, %s236, %s237
      %p241 = pneg %p235
      %p242 = scmp.eq.s32.totalorder %s22, 1
      %p243 = por %p241, %p242
      %p244 = scmp.ne.s32.totalorder %s236, %s239
      %p245 = scmp.eq.s32.totalorder %s22, 0
      %p246 = por %p244, %p245
      %p247 = scmp.ne.s32.totalorder %s236, %s239
      %p248 = scmp.eq.s32.totalorder %s27, 1
      %p249 = por %p247, %p248
      %p250 = scmp.ne.s32.totalorder %s239, %s240
      %p251 = scmp.eq.s32.totalorder %s27, 0
      %p252 = por %p250, %p251
      %p253 = scmp.ne.s32.totalorder %s239, %s240
      %p254 = scmp.eq.s32.totalorder %s28, 1
      %p255 = por %p253, %p254
      %p257 = scmp.ne.s32.totalorder %s240, %s256
      %p258 = scmp.eq.s32.totalorder %s28, 0
      %p259 = por %p257, %p258
      %p260 = scmp.le.s32.totalorder 1, %s22
      %p261 = scmp.lt.s32.totalorder %s22, 3
      %p262 = pnand %p260, %p261
      %p263 = pneg %p262
      // Predicated region
      $region9: #{tpu_custom_call.1} parent=5 // pred_check
        _
      $region10: #{tpu_custom_call.1} parent=5 // pred_check_branch
        %265 = sbr.rel (%p262) target = $region12
      $region11: #{tpu_custom_call.1} parent=5 // pred_region
        %s266 = ssub.s32 %s22, 1
        // Predicated region
        $region13: #{tpu_custom_call.1} parent=11 // pred_check
          %p267 = pneg %p69
        $region14: #{tpu_custom_call.1} parent=11 // pred_check_branch
          %269 = sbr.rel (%p267) target = $region16
        $region15: #{tpu_custom_call.1} parent=11 // pred_region
          _
        $region16: #{tpu_custom_call.1} parent=11 // pred_fallthru
          _
        // Predicated region
        $region17: #{tpu_custom_call.1} parent=11 // pred_check
          %p270 = pneg %p90
        $region18: #{tpu_custom_call.1} parent=11 // pred_check_branch
          %272 = sbr.rel (%p270) target = $region20
        $region19: #{tpu_custom_call.1} parent=11 // pred_region
          _
        $region20: #{tpu_custom_call.1} parent=11 // pred_fallthru
          _
        // Predicated region
        $region21: #{tpu_custom_call.1} parent=11 // pred_check
          %p273 = pneg %p111
        $region22: #{tpu_custom_call.1} parent=11 // pred_check_branch
          %275 = sbr.rel (%p273) target = $region24
        $region23: #{tpu_custom_call.1} parent=11 // pred_region
          _
        $region24: #{tpu_custom_call.1} parent=11 // pred_fallthru
          _
        // Predicated region
        $region25: #{tpu_custom_call.1} parent=11 // pred_check
          %p276 = pneg %p132
        $region26: #{tpu_custom_call.1} parent=11 // pred_check_branch
          %278 = sbr.rel (%p276) target = $region28
        $region27: #{tpu_custom_call.1} parent=11 // pred_region
          _
        $region28: #{tpu_custom_call.1} parent=11 // pred_fallthru
          _
        // Predicated region
        $region29: #{tpu_custom_call.1} parent=11 // pred_check
          %p279 = pneg %p153
        $region30: #{tpu_custom_call.1} parent=11 // pred_check_branch
          %281 = sbr.rel (%p279) target = $region32
        $region31: #{tpu_custom_call.1} parent=11 // pred_region
          _
        $region32: #{tpu_custom_call.1} parent=11 // pred_fallthru
          _
        // Predicated region
        $region33: #{tpu_custom_call.1} parent=11 // pred_check
          %p282 = pneg %p174
        $region34: #{tpu_custom_call.1} parent=11 // pred_check_branch
          %284 = sbr.rel (%p282) target = $region36
        $region35: #{tpu_custom_call.1} parent=11 // pred_region
          _
        $region36: #{tpu_custom_call.1} parent=11 // pred_fallthru
          _
      $region12: #{tpu_custom_call.1} parent=5 // pred_fallthru
        _
      %p285 = scmp.lt.s32.totalorder %s22, 2
      // Predicated region
      $region37: #{tpu_custom_call.1} parent=5 // pred_check
        %p286 = pneg %p285
      $region38: #{tpu_custom_call.1} parent=5 // pred_check_branch
        %288 = sbr.rel (%p286) target = $region40
      $region39: #{tpu_custom_call.1} parent=5 // pred_region
        // Predicated region
        $region41: #{tpu_custom_call.1} parent=39 // pred_check
          %p289 = pneg %p42
        $region42: #{tpu_custom_call.1} parent=39 // pred_check_branch
          %291 = sbr.rel (%p289) target = $region44
        $region43: #{tpu_custom_call.1} parent=39 // pred_region
          %s292 = sand.u32 %s32, 1
          %s293 = scalar_lea.sflag [#allocation3], %s292
          %s294 = sand.u32 %s32, 1
          %s295 = smul.addr %s294, 64
          %s296 = scalar_lea.vmem [#allocation2], %s295
          %298 = vsyncadd %s293, 0
          %s299 = smul.addr %s22, 8
          %s300 = smul.addr %s299, 8
          %s301 = scalar_lea.hbm %s0, %s300
          %s302 = sshll.u32 %s301, 4
          %s303 = int_to_ptr.hbm [resolvable:$true] %s302
          %s304 = sshll.u32 %s296, 4
          %s305 = int_to_ptr.vmem [resolvable:$true] %s304
          %310 = dma.hbm_to_vmem [thread:$0]  %s303, 1024, %s305, %s293, 256, 256, 16
        $region44: #{tpu_custom_call.1} parent=39 // pred_fallthru
          _
      $region40: #{tpu_custom_call.1} parent=5 // pred_fallthru
        _
      %p311 = scmp.le.s32.totalorder 1, %s22
      %p312 = scmp.lt.s32.totalorder %s22, 3
      %p313 = pnand %p311, %p312
      %p314 = pneg %p313
      // Predicated region
      $region45: #{tpu_custom_call.1} parent=5 // pred_check
        _
      $region46: #{tpu_custom_call.1} parent=5 // pred_check_branch
        %316 = sbr.rel (%p313) target = $region48
      $region47: #{tpu_custom_call.1} parent=5 // pred_region
        %s317 = ssub.s32 %s22, 1
        %s318 = sand.u32 %s35, 1
        %s319 = scalar_lea.sflag [#allocation3], %s318
        %s320 = sand.u32 %s35, 1
        %s321 = smul.addr %s320, 64
        %s322 = scalar_lea.vmem [#allocation2], %s321
        // Predicated region
        $region49: #{tpu_custom_call.1} parent=47 // pred_check
          %p323 = pneg %p48
        $region50: #{tpu_custom_call.1} parent=47 // pred_check_branch
          %325 = sbr.rel (%p323) target = $region52
        $region51: #{tpu_custom_call.1} parent=47 // pred_region
          %327 = dma.done %s319, 1024
        $region52: #{tpu_custom_call.1} parent=47 // pred_fallthru
          _
        %s328 = sand.u32 %s35, 1
        %s329 = scalar_lea.sflag [#allocation3], %s328
        %s330 = sand.u32 %s35, 1
        %s331 = smul.addr %s330, 64
        %s332 = scalar_lea.vmem [#allocation2], %s331
        %p333 = pneg %p48
        %p334 = pneg %p45
        %p335 = pneg %p69
        %p336 = pneg %p66
        %p337 = pneg %p90
        %p338 = pneg %p87
        %p339 = pneg %p111
        %p340 = pneg %p108
        %p341 = pneg %p132
        %p342 = pneg %p129
        %p343 = pneg %p153
        %p344 = pneg %p150
        %p345 = pneg %p174
        %p346 = pneg %p171
        %p347 = pneg %p200
        %p348 = pneg %p197
        %s349 = sand.u32 %s187, 1
        %s350 = scalar_lea.sflag [#allocation4], %s349
        %s351 = sand.u32 %s187, 1
        %s352 = smul.addr %s351, 64
        %s353 = scalar_lea.vmem [#allocation5], %s352
        %p354 = pneg %p226
        %p355 = pneg %p223
        %p356 = scmp.lt.s32.totalorder %s27, 1
        %s357 = scalar_select %p356, %s27, 1
        %s358 = smul.addr %s357, 4
        %s359 = smul.addr %s358, 8
        %s360 = scalar_lea.vmem %s8, %s359
        %p361 = pneg %p252
        %p362 = pneg %p249
        %p363 = scmp.lt.s32.totalorder %s27, 1
        %s364 = scalar_select %p363, %s27, 1
        %s365 = smul.addr %s364, 4
        %s366 = smul.addr %s365, 8
        %s367 = scalar_lea.vmem %s9, %s366
        %p368 = scmp.lt.s32.totalorder %s27, 1
        %s369 = scalar_select %p368, %s27, 1
        %s370 = smul.addr %s369, 4
        %s371 = smul.addr %s370, 8
        %s372 = scalar_lea.vmem %s8, %s371
        %p373 = scmp.lt.s32.totalorder %s27, 1
        %s374 = scalar_select %p373, %s27, 1
        %s375 = smul.addr %s374, 4
        %s376 = smul.addr %s375, 8
        %s377 = scalar_lea.vmem %s9, %s376
        %v378 = vld [vmem:[%s322] sm:$0xff]
        %v379 = vld [vmem:[%s322 + $0x8] sm:$0xff]
        %v380 = vld [vmem:[%s322 + $0x10] sm:$0xff]
        %v381 = vld [vmem:[%s322 + $0x18] sm:$0xff]
        %v382 = vld [vmem:[%s322 + $0x20] sm:$0xff]
        %v383 = vld [vmem:[%s322 + $0x28] sm:$0xff]
        %v384 = vld [vmem:[%s322 + $0x30] sm:$0xff]
        %v385 = vld [vmem:[%s322 + $0x38] sm:$0xff]
        %v386 = vadd.f32 %v378, %v379
        %v387 = vadd.f32 %v386, %v380
        %v388 = vadd.f32 %v387, %v381
        %v389 = vadd.f32 %v388, %v382
        %v390 = vadd.f32 %v389, %v383
        %v391 = vadd.f32 %v390, %v384
        %v392 = vadd.f32 %v391, %v385
        %393 = vadd.xlane.f32.xlu0 %v392
        %v394 = vpop.xlane.xlu0 %393
        %v395 = vrot.slane %v394, 4
        %v396 = vadd.f32 %v394, %v395
        %v397 = vrot.slane %v396, 2
        %v398 = vadd.f32 %v396, %v397
        %v399 = vrot.slane %v398, 1
        %v400 = vadd.f32 %v398, %v399
        %s401 = vtos %v400
        %s402 = smul.f32 %s401, 0.00012207031
        %v403 = vstv %s402
        %v404 = vsub.f32 %v378, %v403
        %v405 = vsub.f32 %v379, %v403
        %v406 = vsub.f32 %v380, %v403
        %v407 = vsub.f32 %v381, %v403
        %v408 = vsub.f32 %v382, %v403
        %v409 = vsub.f32 %v383, %v403
        %v410 = vsub.f32 %v384, %v403
        %v411 = vsub.f32 %v385, %v403
        %v412 = vmul.f32 %v404, %v404
        %v413 = vmul.f32 %v405, %v405
        %v414 = vmul.f32 %v406, %v406
        %v415 = vmul.f32 %v407, %v407
        %v416 = vmul.f32 %v408, %v408
        %v417 = vmul.f32 %v409, %v409
        %v418 = vmul.f32 %v410, %v410
        %v419 = vmul.f32 %v411, %v411
        %v420 = vadd.f32 %v412, %v413
        %v421 = vadd.f32 %v420, %v414
        %v422 = vadd.f32 %v421, %v415
        %v423 = vadd.f32 %v422, %v416
        %v424 = vadd.f32 %v423, %v417
        %v425 = vadd.f32 %v424, %v418
        %v426 = vadd.f32 %v425, %v419
        %427 = vadd.xlane.f32.xlu0 %v426
        %v428 = vpop.xlane.xlu0 %427
        %v429 = vrot.slane %v428, 4
        %v430 = vadd.f32 %v428, %v429
        %v431 = vrot.slane %v430, 2
        %v432 = vadd.f32 %v430, %v431
        %v433 = vrot.slane %v432, 1
        %v434 = vadd.f32 %v432, %v433
        %s435 = vtos %v434
        %s436 = smul.f32 %s435, 0.00012207031
        %s437 = sadd.f32 %s436, 1e-05
        %v438 = vstv %s437
        %v439 = vrsqrt.pop %v438
        %v440 = vmul.f32 %v439, %v438
        %v441 = vmul.f32 %v440, %v439
        %v442 = vmul.f32 0.5, %v441
        %v443 = vsub.f32 1.5, %v442
        %v444 = vmul.f32 %v439, %v443
        %v445 = vmul.f32 %v438, %v444
        %vm446 = vcmp.eq.f32.partialorder %v438, inf
        %v447 = vsel %vm446, %v438, %v445
        %vm448 = vcmp.eq.f32.partialorder %v438, 0.0
        %v449 = vand.u32 %v438, 2147483648
        %v450 = vsel %vm448, %v449, %v447
        %s451 = vtos %v450
        %v452 = vstv %s451
        %v453 = vrcp.pop %v452
        %v454 = vmul.f32 %v452, %v453
        %v455 = vsub.f32 1.0, %v454
        %v456 = vmul.f32 %v453, %v455
        %v457 = vadd.f32 %v453, %v456
        %vm458 = vweird.f32 %v452
        %vm459 = vweird.f32 %v453
        %vm460 = vmor %vm458, %vm459
        %v461 = vsel %vm460, %v453, %v457
        %v462 = vand.u32 2147483647, %v452
        %vm463 = vcmp.eq.f32.partialorder %v462, 8.507059e+37
        %v464 = vand.u32 %v452, 2147483648
        %v465 = vor.u32 1.1754944e-38, %v464
        %v466 = vsel %vm463, %v465, %v461
        %s467 = vtos %v466
        %v468 = vstv %s467
        %v469 = vmul.f32 %v404, %v468
        %v470 = vmul.f32 %v405, %v468
        %v471 = vmul.f32 %v406, %v468
        %v472 = vmul.f32 %v407, %v468
        %v473 = vmul.f32 %v408, %v468
        %v474 = vmul.f32 %v409, %v468
        %v475 = vmul.f32 %v410, %v468
        %v476 = vmul.f32 %v411, %v468
        %v477 = vld [vmem:[%s1] sm:$0xff]
        %v478 = vld [vmem:[%s1 + $0x8] sm:$0xff]
        %v479 = vld [vmem:[%s1 + $0x10] sm:$0xff]
        %v480 = vld [vmem:[%s1 + $0x18] sm:$0xff]
        %482 = vset.pattern.permute.xlu0 0
        %483 = vperm.xlu0 %482, %v477
        %v484 = vpop.permute.xlu0 %483
        %487 = vset.pattern.permute.xlu0 0
        %488 = vperm.xlu0 %487, %v478
        %v489 = vpop.permute.xlu0 %488
        %492 = vset.pattern.permute.xlu0 0
        %493 = vperm.xlu0 %492, %v479
        %v494 = vpop.permute.xlu0 %493
        %497 = vset.pattern.permute.xlu0 0
        %498 = vperm.xlu0 %497, %v480
        %v499 = vpop.permute.xlu0 %498
        %v501 = vmul.f32 %v469, %v484
        %v502 = vmul.f32 %v470, %v484
        %v503 = vmul.f32 %v471, %v489
        %v504 = vmul.f32 %v472, %v489
        %v505 = vmul.f32 %v473, %v494
        %v506 = vmul.f32 %v474, %v494
        %v507 = vmul.f32 %v475, %v499
        %v508 = vmul.f32 %v476, %v499
        %v509 = vld [vmem:[%s2] sm:$0xff]
        %v510 = vld [vmem:[%s2 + $0x8] sm:$0xff]
        %v511 = vld [vmem:[%s2 + $0x10] sm:$0xff]
        %v512 = vld [vmem:[%s2 + $0x18] sm:$0xff]
        %514 = vset.pattern.permute.xlu0 0
        %515 = vperm.xlu0 %514, %v509
        %v516 = vpop.permute.xlu0 %515
        %519 = vset.pattern.permute.xlu0 0
        %520 = vperm.xlu0 %519, %v510
        %v521 = vpop.permute.xlu0 %520
        %524 = vset.pattern.permute.xlu0 0
        %525 = vperm.xlu0 %524, %v511
        %v526 = vpop.permute.xlu0 %525
        %529 = vset.pattern.permute.xlu0 0
        %530 = vperm.xlu0 %529, %v512
        %v531 = vpop.permute.xlu0 %530
        %v533 = vadd.f32 %v501, %v516
        %v534 = vadd.f32 %v502, %v516
        %v535 = vadd.f32 %v503, %v521
        %v536 = vadd.f32 %v504, %v521
        %v537 = vadd.f32 %v505, %v526
        %v538 = vadd.f32 %v506, %v526
        %v539 = vadd.f32 %v507, %v531
        %v540 = vadd.f32 %v508, %v531
        %541 = vst [vmem:[%s353] sm:$0xff] %v533
        %542 = vst [vmem:[%s353 + $0x8] sm:$0xff] %v534
        %543 = vst [vmem:[%s353 + $0x10] sm:$0xff] %v535
        %544 = vst [vmem:[%s353 + $0x18] sm:$0xff] %v536
        %545 = vst [vmem:[%s353 + $0x20] sm:$0xff] %v537
        %546 = vst [vmem:[%s353 + $0x28] sm:$0xff] %v538
        %547 = vst [vmem:[%s353 + $0x30] sm:$0xff] %v539
        %548 = vst [vmem:[%s353 + $0x38] sm:$0xff] %v540
        %v549 = vld [vmem:[%s3] sm:$0xff]
        %v550 = vld [vmem:[%s3 + $0x8] sm:$0xff]
        %v551 = vld [vmem:[%s3 + $0x10] sm:$0xff]
        %v552 = vld [vmem:[%s3 + $0x18] sm:$0xff]
        %v553 = vstv %s451
        %v554 = vmul.f32 %v549, %v553
        %v555 = vmul.f32 %v550, %v553
        %v556 = vmul.f32 %v551, %v553
        %v557 = vmul.f32 %v552, %v553
        %v558 = vld [vmem:[%s4] sm:$0xff]
        %v559 = vld [vmem:[%s4 + $0x8] sm:$0xff]
        %v560 = vld [vmem:[%s4 + $0x10] sm:$0xff]
        %v561 = vld [vmem:[%s4 + $0x18] sm:$0xff]
        %v562 = vadd.f32 %v554, %v558
        %v563 = vadd.f32 %v555, %v559
        %v564 = vadd.f32 %v556, %v560
        %v565 = vadd.f32 %v557, %v561
        %vm566 = vcmask 7168
        %567 = vst.msk [vmem:[%s372] sm:$0xff] %vm566, %v562
        %568 = vst.msk [vmem:[%s372 + $0x8] sm:$0xff] %vm566, %v563
        %569 = vst.msk [vmem:[%s372 + $0x10] sm:$0xff] %vm566, %v564
        %570 = vst.msk [vmem:[%s372 + $0x18] sm:$0xff] %vm566, %v565
        %v571 = vld [vmem:[%s5] sm:$0xff]
        %v572 = vld [vmem:[%s5 + $0x8] sm:$0xff]
        %v573 = vld [vmem:[%s5 + $0x10] sm:$0xff]
        %v574 = vld [vmem:[%s5 + $0x18] sm:$0xff]
        %v575 = vmul.f32 %v571, %v403
        %v576 = vmul.f32 %v572, %v403
        %v577 = vmul.f32 %v573, %v403
        %v578 = vmul.f32 %v574, %v403
        %v579 = vld [vmem:[%s6] sm:$0xff]
        %v580 = vld [vmem:[%s6 + $0x8] sm:$0xff]
        %v581 = vld [vmem:[%s6 + $0x10] sm:$0xff]
        %v582 = vld [vmem:[%s6 + $0x18] sm:$0xff]
        %v583 = vadd.f32 %v575, %v579
        %v584 = vadd.f32 %v576, %v580
        %v585 = vadd.f32 %v577, %v581
        %v586 = vadd.f32 %v578, %v582
        %587 = vst.msk [vmem:[%s377] sm:$0xff] %vm566, %v583
        %588 = vst.msk [vmem:[%s377 + $0x8] sm:$0xff] %vm566, %v584
        %589 = vst.msk [vmem:[%s377 + $0x10] sm:$0xff] %vm566, %v585
        %590 = vst.msk [vmem:[%s377 + $0x18] sm:$0xff] %vm566, %v586
        %s591 = sand.u32 %s187, 1
        %s592 = scalar_lea.sflag [#allocation4], %s591
        %s593 = sand.u32 %s187, 1
        %s594 = smul.addr %s593, 64
        %s595 = scalar_lea.vmem [#allocation5], %s594
        %p596 = scmp.lt.s32.totalorder %s27, 1
        %s597 = scalar_select %p596, %s27, 1
        %s598 = smul.addr %s597, 4
        %s599 = smul.addr %s598, 8
        %s600 = scalar_lea.vmem %s8, %s599
        %p601 = scmp.lt.s32.totalorder %s27, 1
        %s602 = scalar_select %p601, %s27, 1
        %s603 = smul.addr %s602, 4
        %s604 = smul.addr %s603, 8
        %s605 = scalar_lea.vmem %s9, %s604
        // Predicated region
        $region53: #{tpu_custom_call.1} parent=47 // pred_check
          %p606 = pneg %p197
        $region54: #{tpu_custom_call.1} parent=47 // pred_check_branch
          %608 = sbr.rel (%p606) target = $region56
        $region55: #{tpu_custom_call.1} parent=47 // pred_region
          %610 = vsyncadd %s592, 0
          %s611 = smul.addr %s27, 8
          %s612 = smul.addr %s611, 8
          %s613 = scalar_lea.hbm %s7, %s612
          %s614 = sshll.u32 %s595, 4
          %s615 = int_to_ptr.vmem [resolvable:$true] %s614
          %s616 = sshll.u32 %s613, 4
          %s617 = int_to_ptr.hbm [resolvable:$true] %s616
          %622 = dma.vmem_to_hbm [thread:$0]  %s615, 1024, %s617, %s592, 256, 256, 16
        $region56: #{tpu_custom_call.1} parent=47 // pred_fallthru
          _
        // Predicated region
        $region57: #{tpu_custom_call.1} parent=47 // pred_check
          %p623 = pneg %p223
        $region58: #{tpu_custom_call.1} parent=47 // pred_check_branch
          %625 = sbr.rel (%p623) target = $region60
        $region59: #{tpu_custom_call.1} parent=47 // pred_region
          _
        $region60: #{tpu_custom_call.1} parent=47 // pred_fallthru
          _
        // Predicated region
        $region61: #{tpu_custom_call.1} parent=47 // pred_check
          %p626 = pneg %p249
        $region62: #{tpu_custom_call.1} parent=47 // pred_check_branch
          %628 = sbr.rel (%p626) target = $region64
        $region63: #{tpu_custom_call.1} parent=47 // pred_region
          _
        $region64: #{tpu_custom_call.1} parent=47 // pred_fallthru
          _
      $region48: #{tpu_custom_call.1} parent=5 // pred_fallthru
        _
      %p629 = scmp.le.s32.totalorder 2, %s22
      // Predicated region
      $region65: #{tpu_custom_call.1} parent=5 // pred_check
        %p630 = pneg %p629
      $region66: #{tpu_custom_call.1} parent=5 // pred_check_branch
        %632 = sbr.rel (%p630) target = $region68
      $region67: #{tpu_custom_call.1} parent=5 // pred_region
        %s633 = ssub.s32 %s22, 2
        // Predicated region
        $region69: #{tpu_custom_call.1} parent=67 // pred_check
          %p634 = pneg %p203
        $region70: #{tpu_custom_call.1} parent=67 // pred_check_branch
          %636 = sbr.rel (%p634) target = $region72
        $region71: #{tpu_custom_call.1} parent=67 // pred_region
          %s637 = sand.u32 %s188, 1
          %s638 = scalar_lea.sflag [#allocation4], %s637
          %s639 = sand.u32 %s188, 1
          %s640 = smul.addr %s639, 64
          %s641 = scalar_lea.vmem [#allocation5], %s640
          %643 = dma.done %s638, 1024
        $region72: #{tpu_custom_call.1} parent=67 // pred_fallthru
          _
        // Predicated region
        $region73: #{tpu_custom_call.1} parent=67 // pred_check
          %p644 = pneg %p229
        $region74: #{tpu_custom_call.1} parent=67 // pred_check_branch
          %646 = sbr.rel (%p644) target = $region76
        $region75: #{tpu_custom_call.1} parent=67 // pred_region
          %p647 = scmp.lt.s32.totalorder %s28, 1
          %s648 = scalar_select %p647, %s28, 1
          %s649 = smul.addr %s648, 4
          %s650 = smul.addr %s649, 8
          %s651 = scalar_lea.vmem %s8, %s650
        $region76: #{tpu_custom_call.1} parent=67 // pred_fallthru
          _
        // Predicated region
        $region77: #{tpu_custom_call.1} parent=67 // pred_check
          %p652 = pneg %p255
        $region78: #{tpu_custom_call.1} parent=67 // pred_check_branch
          %654 = sbr.rel (%p652) target = $region80
        $region79: #{tpu_custom_call.1} parent=67 // pred_region
          %p655 = scmp.lt.s32.totalorder %s28, 1
          %s656 = scalar_select %p655, %s28, 1
          %s657 = smul.addr %s656, 4
          %s658 = smul.addr %s657, 8
          %s659 = scalar_lea.vmem %s9, %s658
        $region80: #{tpu_custom_call.1} parent=67 // pred_fallthru
          _
      $region68: #{tpu_custom_call.1} parent=5 // pred_fallthru
        _
    $region6: #{tpu_custom_call.1} parent=1 // loop_footer
      %s26 = sadd.s32 1, %s22
    $region7: #{tpu_custom_call.1} parent=1 // loop_footer_branch
      %21 = sbr.rel target = $region3
    $region8: #{tpu_custom_call.1} parent=1 // loop_exit
      _
    %660 = vsyncpa [#allocation3], 1
    %s661 = scalar_lea.sflag [#allocation3], 1
    %662 = vsyncpa %s661, 1
    %663 = vsyncpa [#allocation4], 1
    %s664 = scalar_lea.sflag [#allocation4], 1
    %665 = vsyncpa %s664, 1

</llo_original>
